<compile_context>
chip_gen: v5e
topology: v5e:2x2
jax: 0.10.0
libtpu: 0.0.40
codegen_flags: <defaults>
</compile_context>

<pallas_src>
import jax
import jax.numpy as jnp
from jax import lax
from jax.experimental import pallas as pl
from jax.experimental.pallas import tpu as pltpu

KERNEL = 3            # kernel size used by the module
PAD = KERNEL // 2     # circular padding width


def _circular_conv3x3(x, w, b, first_col, last_col, H, W):
    """One circular depthwise 3x3 conv on flattened-spatial data.

    x:         (R, H*W) f32, row r = b*C + c, spatial flattened row-major (i*W + j).
    w:         (R, 9)   f32, per-row kernel taps (tap = di*3 + dj).
    b:         (R, 1)   f32 bias (broadcast along lanes).
    first_col: (R, H*W) bool, lane is spatial column j == 0.
    last_col:  (R, H*W) bool, lane is spatial column j == W-1.
    """
    HW = H * W
    # W-direction shifted copies: a flat lane roll is a circular W shift except at
    # the wrap column, which is fixed up by selecting from a W-offset roll.
    xm = jnp.where(first_col,
                   pltpu.roll(x, (1 - W) % HW, axis=1),
                   pltpu.roll(x, 1, axis=1))            # x[i, (j-1) % W]
    xp = jnp.where(last_col,
                   pltpu.roll(x, W - 1, axis=1),
                   pltpu.roll(x, HW - 1, axis=1))       # x[i, (j+1) % W]

    def wcol(t):
        return w[:, t:t + 1]                            # (R, 1): lane-broadcast column

    r0 = wcol(0) * xm + wcol(1) * x + wcol(2) * xp      # weighted source row i-1
    r1 = wcol(3) * xm + wcol(4) * x + wcol(5) * xp      # weighted source row i
    r2 = wcol(6) * xm + wcol(7) * x + wcol(8) * xp      # weighted source row i+1

    # H-direction circular shifts are exact flat rolls by +-W in row-major layout.
    return pltpu.roll(r0, W, axis=1) + r1 + pltpu.roll(r2, HW - W, axis=1) + b


def _pick_row_tile(R, HW, target_bytes):
    """Rows per block: whole tensor if it fits the target, else the largest
    multiple-of-8 divisor of R within the target (fallback: R)."""
    target_rows = max(8, target_bytes // (HW * 4))
    if R <= target_rows:
        return R
    best = R
    t = 8
    while t < R:
        if R % t == 0 and t <= target_rows:
            best = t
        t += 8
    return best


def depthwise_module(x, w1, b1, w2, b2):
    """x: (B, C, H, W); w*: (C, 1, 3, 3) (PyTorch depthwise layout); b*: (C,)."""
    B, C, H, W = x.shape
    HW, R = H * W, B * C

    def prep_w(w):
        # (C, 1, 3, 3) -> (C, 9), tiled over batch so row b*C + c carries channel c.
        return jnp.tile(w.reshape(C, KERNEL * KERNEL).astype(jnp.float32), (B, 1))

    def prep_b(b):
        return jnp.tile(b.astype(jnp.float32), B).reshape(R, 1)

    try:
        vmem_cap = int(pltpu.get_tpu_info().vmem_capacity_bytes)
    except Exception:
        vmem_cap = 64 << 20                              # conservative (v7x per-TC)

    row_tile = _pick_row_tile(R, HW, min(4 << 20, vmem_cap // 16))
    assert R % row_tile == 0
    grid = (R // row_tile,)

    block_bytes = row_tile * HW * 4
    vmem_limit = int(min(vmem_cap, max(4 << 20, 5 * block_bytes + (1 << 20))))

    x_spec = pl.BlockSpec((row_tile, HW), lambda r: (r, 0))
    w_spec = pl.BlockSpec((row_tile, KERNEL * KERNEL), lambda r: (r, 0))
    b_spec = pl.BlockSpec((row_tile, 1), lambda r: (r, 0))

    def kernel(x_ref, w1_ref, b1_ref, w2_ref, b2_ref, o_ref):
        xx = x_ref[...].astype(jnp.float32)
        col = lax.broadcasted_iota(jnp.int32, xx.shape, 1) % W   # hoisted once per block
        first_col = col == 0
        last_col = col == W - 1
        y = _circular_conv3x3(xx, w1_ref[...], b1_ref[...], first_col, last_col, H, W)
        z = _circular_conv3x3(y, w2_ref[...], b2_ref[...], first_col, last_col, H, W)
        o_ref[...] = z.astype(o_ref.dtype)

    cost = pl.CostEstimate(
        flops=2 * 2 * KERNEL * KERNEL * R * HW,         # 2 convs x 9 taps x (mul + add)
        transcendentals=0,
        bytes_accessed=(2 * R * HW + 2 * R * (KERNEL * KERNEL + 1)) * 4,
    )

    out_flat = pl.pallas_call(
        kernel,
        out_shape=jax.ShapeDtypeStruct((R, HW), x.dtype),
        grid=grid,
        in_specs=[x_spec, w_spec, b_spec, w_spec, b_spec],
        out_specs=x_spec,
        compiler_params=pltpu.CompilerParams(
            dimension_semantics=("parallel",),
            vmem_limit_bytes=vmem_limit,
        ),
        cost_estimate=cost,
    )(x.reshape(R, HW), prep_w(w1), prep_b(b1), prep_w(w2), prep_b(b2))

    return out_flat.reshape(B, C, H, W)


def reference_forward(x, w1, b1, w2, b2):
    """Pure-JAX reference: circular pad + VALID grouped conv (PyTorch semantics)."""
    def one(x, w, b):
        xp = jnp.pad(x, ((0, 0), (0, 0), (PAD, PAD), (PAD, PAD)), mode="wrap")
        y = lax.conv_general_dilated(
            xp, w, window_strides=(1, 1), padding="VALID",
            dimension_numbers=("NCHW", "OIHW", "NCHW"),
            feature_group_count=x.shape[1])
        return y + b[None, :, None, None]
    return one(one(x, w1, b1), w2, b2)


if __name__ == "__main__":
    B, C, H, W = 2, 4, 16, 16
    key = jax.random.PRNGKey(0)
    kx, kw1, kb1, kw2, kb2 = jax.random.split(key, 5)

    # PyTorch default conv init: U(-1/sqrt(fan_in), 1/sqrt(fan_in)), fan_in = 1*3*3 = 9
    bound = 1.0 / 3.0
    x = jax.random.normal(kx, (B, C, H, W), dtype=jnp.float32)
    w1 = jax.random.uniform(kw1, (C, 1, KERNEL, KERNEL), jnp.float32, -bound, bound)
    b1 = jax.random.uniform(kb1, (C,), jnp.float32, -bound, bound)
    w2 = jax.random.uniform(kw2, (C, 1, KERNEL, KERNEL), jnp.float32, -bound, bound)
    b2 = jax.random.uniform(kb2, (C,), jnp.float32, -bound, bound)

    out = jax.block_until_ready(depthwise_module(x, w1, b1, w2, b2))
    ref = jax.block_until_ready(reference_forward(x, w1, b1, w2, b2))

    assert out.shape == (B, C, H, W)
    assert jnp.allclose(out, ref, atol=1e-5, rtol=1e-5), "mismatch vs reference"

    print("KERNEL_OK")
</pallas_src>

<mosaic_0001>
module attributes {stable_mosaic.version = 11 : i64} {
  func.func @kernel(%arg0: i32, %arg1: memref<8x256xf32, #tpu.memory_space<vmem>>, %arg2: memref<8x9xf32, #tpu.memory_space<vmem>>, %arg3: memref<8x1xf32, #tpu.memory_space<vmem>>, %arg4: memref<8x9xf32, #tpu.memory_space<vmem>>, %arg5: memref<8x1xf32, #tpu.memory_space<vmem>>, %arg6: memref<8x256xf32, #tpu.memory_space<vmem>>) attributes {dimension_semantics = [#tpu.dimension_semantics<parallel>], iteration_bounds = array<i64: 1>, scalar_prefetch = 0 : i64, scratch_operands = 0 : i64, tpu.core_type = #tpu.core_type<tc>, window_params = [{transform_indices = @transform_0, window_bounds = array<i64: 8, 256>}, {transform_indices = @transform_1, window_bounds = array<i64: 8, 9>}, {transform_indices = @transform_2, window_bounds = array<i64: 8, 1>}, {transform_indices = @transform_3, window_bounds = array<i64: 8, 9>}, {transform_indices = @transform_4, window_bounds = array<i64: 8, 1>}, {transform_indices = @transform_5, window_bounds = array<i64: 8, 256>}]} {
    %c0 = arith.constant 0 : index
    %c0_0 = arith.constant 0 : index
    %0 = vector.load %arg1[%c0, %c0_0] : memref<8x256xf32, #tpu.memory_space<vmem>>, vector<8x256xf32>
    %1 = tpu.iota {dimensions = array<i32: 1>} : vector<8x256xi32>
    %c16_i32 = arith.constant 16 : i32
    %c0_i32 = arith.constant 0 : i32
    %2 = arith.cmpi eq, %c16_i32, %c0_i32 : i32
    %c1_i32 = arith.constant 1 : i32
    %3 = arith.select %2, %c1_i32, %c16_i32 : i32
    %4 = vector.broadcast %3 : i32 to vector<8x256xi32>
    %5 = arith.remsi %1, %4 : vector<8x256xi32>
    %c0_i32_1 = arith.constant 0 : i32
    %6 = vector.broadcast %c0_i32_1 : i32 to vector<8x256xi32>
    %7 = arith.cmpi ne, %5, %6 : vector<8x256xi32>
    %c0_i32_2 = arith.constant 0 : i32
    %8 = vector.broadcast %c0_i32_2 : i32 to vector<8x256xi32>
    %9 = arith.cmpi slt, %5, %8 : vector<8x256xi32>
    %c0_i32_3 = arith.constant 0 : i32
    %10 = arith.cmpi slt, %3, %c0_i32_3 : i32
    %11 = vector.broadcast %10 : i1 to vector<8x256xi1>
    %12 = vector.broadcast %11 : vector<8x256xi1> to vector<8x256xi1>
    %13 = arith.xori %9, %12 : vector<8x256xi1>
    %14 = arith.andi %13, %7 : vector<8x256xi1>
    %15 = vector.broadcast %3 : i32 to vector<8x256xi32>
    %16 = arith.addi %5, %15 : vector<8x256xi32>
    %17 = arith.select %14, %16, %5 : vector<8x256xi1>, vector<8x256xi32>
    %c0_i32_4 = arith.constant 0 : i32
    %18 = vector.broadcast %c0_i32_4 : i32 to vector<8x256xi32>
    %19 = arith.cmpi eq, %17, %18 : vector<8x256xi32>
    %c15_i32 = arith.constant 15 : i32
    %20 = vector.broadcast %c15_i32 : i32 to vector<8x256xi32>
    %21 = arith.cmpi eq, %17, %20 : vector<8x256xi32>
    %c0_5 = arith.constant 0 : index
    %c0_6 = arith.constant 0 : index
    %22 = vector.load %arg2[%c0_5, %c0_6] : memref<8x9xf32, #tpu.memory_space<vmem>>, vector<8x9xf32>
    %c0_7 = arith.constant 0 : index
    %c0_8 = arith.constant 0 : index
    %23 = vector.load %arg3[%c0_7, %c0_8] : memref<8x1xf32, #tpu.memory_space<vmem>>, vector<8x1xf32>
    %c241_i32 = arith.constant 241 : i32
    %24 = tpu.dynamic_rotate %0 by %c241_i32 dim 1 : vector<8x256xf32>, i32 -> vector<8x256xf32>
    %c1_i32_9 = arith.constant 1 : i32
    %25 = tpu.dynamic_rotate %0 by %c1_i32_9 dim 1 : vector<8x256xf32>, i32 -> vector<8x256xf32>
    %26 = arith.select %19, %24, %25 : vector<8x256xi1>, vector<8x256xf32>
    %c15_i32_10 = arith.constant 15 : i32
    %27 = tpu.dynamic_rotate %0 by %c15_i32_10 dim 1 : vector<8x256xf32>, i32 -> vector<8x256xf32>
    %c255_i32 = arith.constant 255 : i32
    %28 = tpu.dynamic_rotate %0 by %c255_i32 dim 1 : vector<8x256xf32>, i32 -> vector<8x256xf32>
    %29 = arith.select %21, %27, %28 : vector<8x256xi1>, vector<8x256xf32>
    %30 = vector.extract_strided_slice %22 {offsets = [0, 0], sizes = [8, 1], strides = [1, 1]} : vector<8x9xf32> to vector<8x1xf32>
    %31 = vector.broadcast %30 : vector<8x1xf32> to vector<8x256xf32>
    %32 = arith.mulf %31, %26 : vector<8x256xf32>
    %33 = vector.extract_strided_slice %22 {offsets = [0, 1], sizes = [8, 1], strides = [1, 1]} : vector<8x9xf32> to vector<8x1xf32>
    %34 = vector.broadcast %33 : vector<8x1xf32> to vector<8x256xf32>
    %35 = arith.mulf %34, %0 : vector<8x256xf32>
    %36 = arith.addf %32, %35 : vector<8x256xf32>
    %37 = vector.extract_strided_slice %22 {offsets = [0, 2], sizes = [8, 1], strides = [1, 1]} : vector<8x9xf32> to vector<8x1xf32>
    %38 = vector.broadcast %37 : vector<8x1xf32> to vector<8x256xf32>
    %39 = arith.mulf %38, %29 : vector<8x256xf32>
    %40 = arith.addf %36, %39 : vector<8x256xf32>
    %41 = vector.extract_strided_slice %22 {offsets = [0, 3], sizes = [8, 1], strides = [1, 1]} : vector<8x9xf32> to vector<8x1xf32>
    %42 = vector.broadcast %41 : vector<8x1xf32> to vector<8x256xf32>
    %43 = arith.mulf %42, %26 : vector<8x256xf32>
    %44 = vector.extract_strided_slice %22 {offsets = [0, 4], sizes = [8, 1], strides = [1, 1]} : vector<8x9xf32> to vector<8x1xf32>
    %45 = vector.broadcast %44 : vector<8x1xf32> to vector<8x256xf32>
    %46 = arith.mulf %45, %0 : vector<8x256xf32>
    %47 = arith.addf %43, %46 : vector<8x256xf32>
    %48 = vector.extract_strided_slice %22 {offsets = [0, 5], sizes = [8, 1], strides = [1, 1]} : vector<8x9xf32> to vector<8x1xf32>
    %49 = vector.broadcast %48 : vector<8x1xf32> to vector<8x256xf32>
    %50 = arith.mulf %49, %29 : vector<8x256xf32>
    %51 = arith.addf %47, %50 : vector<8x256xf32>
    %52 = vector.extract_strided_slice %22 {offsets = [0, 6], sizes = [8, 1], strides = [1, 1]} : vector<8x9xf32> to vector<8x1xf32>
    %53 = vector.broadcast %52 : vector<8x1xf32> to vector<8x256xf32>
    %54 = arith.mulf %53, %26 : vector<8x256xf32>
    %55 = vector.extract_strided_slice %22 {offsets = [0, 7], sizes = [8, 1], strides = [1, 1]} : vector<8x9xf32> to vector<8x1xf32>
    %56 = vector.broadcast %55 : vector<8x1xf32> to vector<8x256xf32>
    %57 = arith.mulf %56, %0 : vector<8x256xf32>
    %58 = arith.addf %54, %57 : vector<8x256xf32>
    %59 = vector.extract_strided_slice %22 {offsets = [0, 8], sizes = [8, 1], strides = [1, 1]} : vector<8x9xf32> to vector<8x1xf32>
    %60 = vector.broadcast %59 : vector<8x1xf32> to vector<8x256xf32>
    %61 = arith.mulf %60, %29 : vector<8x256xf32>
    %62 = arith.addf %58, %61 : vector<8x256xf32>
    %c16_i32_11 = arith.constant 16 : i32
    %63 = tpu.dynamic_rotate %40 by %c16_i32_11 dim 1 : vector<8x256xf32>, i32 -> vector<8x256xf32>
    %64 = arith.addf %63, %51 : vector<8x256xf32>
    %c240_i32 = arith.constant 240 : i32
    %65 = tpu.dynamic_rotate %62 by %c240_i32 dim 1 : vector<8x256xf32>, i32 -> vector<8x256xf32>
    %66 = arith.addf %64, %65 : vector<8x256xf32>
    %67 = vector.broadcast %23 : vector<8x1xf32> to vector<8x256xf32>
    %68 = arith.addf %66, %67 : vector<8x256xf32>
    %c0_12 = arith.constant 0 : index
    %c0_13 = arith.constant 0 : index
    %69 = vector.load %arg4[%c0_12, %c0_13] : memref<8x9xf32, #tpu.memory_space<vmem>>, vector<8x9xf32>
    %c0_14 = arith.constant 0 : index
    %c0_15 = arith.constant 0 : index
    %70 = vector.load %arg5[%c0_14, %c0_15] : memref<8x1xf32, #tpu.memory_space<vmem>>, vector<8x1xf32>
    %c241_i32_16 = arith.constant 241 : i32
    %71 = tpu.dynamic_rotate %68 by %c241_i32_16 dim 1 : vector<8x256xf32>, i32 -> vector<8x256xf32>
    %c1_i32_17 = arith.constant 1 : i32
    %72 = tpu.dynamic_rotate %68 by %c1_i32_17 dim 1 : vector<8x256xf32>, i32 -> vector<8x256xf32>
    %73 = arith.select %19, %71, %72 : vector<8x256xi1>, vector<8x256xf32>
    %c15_i32_18 = arith.constant 15 : i32
    %74 = tpu.dynamic_rotate %68 by %c15_i32_18 dim 1 : vector<8x256xf32>, i32 -> vector<8x256xf32>
    %c255_i32_19 = arith.constant 255 : i32
    %75 = tpu.dynamic_rotate %68 by %c255_i32_19 dim 1 : vector<8x256xf32>, i32 -> vector<8x256xf32>
    %76 = arith.select %21, %74, %75 : vector<8x256xi1>, vector<8x256xf32>
    %77 = vector.extract_strided_slice %69 {offsets = [0, 0], sizes = [8, 1], strides = [1, 1]} : vector<8x9xf32> to vector<8x1xf32>
    %78 = vector.broadcast %77 : vector<8x1xf32> to vector<8x256xf32>
    %79 = arith.mulf %78, %73 : vector<8x256xf32>
    %80 = vector.extract_strided_slice %69 {offsets = [0, 1], sizes = [8, 1], strides = [1, 1]} : vector<8x9xf32> to vector<8x1xf32>
    %81 = vector.broadcast %80 : vector<8x1xf32> to vector<8x256xf32>
    %82 = arith.mulf %81, %68 : vector<8x256xf32>
    %83 = arith.addf %79, %82 : vector<8x256xf32>
    %84 = vector.extract_strided_slice %69 {offsets = [0, 2], sizes = [8, 1], strides = [1, 1]} : vector<8x9xf32> to vector<8x1xf32>
    %85 = vector.broadcast %84 : vector<8x1xf32> to vector<8x256xf32>
    %86 = arith.mulf %85, %76 : vector<8x256xf32>
    %87 = arith.addf %83, %86 : vector<8x256xf32>
    %88 = vector.extract_strided_slice %69 {offsets = [0, 3], sizes = [8, 1], strides = [1, 1]} : vector<8x9xf32> to vector<8x1xf32>
    %89 = vector.broadcast %88 : vector<8x1xf32> to vector<8x256xf32>
    %90 = arith.mulf %89, %73 : vector<8x256xf32>
    %91 = vector.extract_strided_slice %69 {offsets = [0, 4], sizes = [8, 1], strides = [1, 1]} : vector<8x9xf32> to vector<8x1xf32>
    %92 = vector.broadcast %91 : vector<8x1xf32> to vector<8x256xf32>
    %93 = arith.mulf %92, %68 : vector<8x256xf32>
    %94 = arith.addf %90, %93 : vector<8x256xf32>
    %95 = vector.extract_strided_slice %69 {offsets = [0, 5], sizes = [8, 1], strides = [1, 1]} : vector<8x9xf32> to vector<8x1xf32>
    %96 = vector.broadcast %95 : vector<8x1xf32> to vector<8x256xf32>
    %97 = arith.mulf %96, %76 : vector<8x256xf32>
    %98 = arith.addf %94, %97 : vector<8x256xf32>
    %99 = vector.extract_strided_slice %69 {offsets = [0, 6], sizes = [8, 1], strides = [1, 1]} : vector<8x9xf32> to vector<8x1xf32>
    %100 = vector.broadcast %99 : vector<8x1xf32> to vector<8x256xf32>
    %101 = arith.mulf %100, %73 : vector<8x256xf32>
    %102 = vector.extract_strided_slice %69 {offsets = [0, 7], sizes = [8, 1], strides = [1, 1]} : vector<8x9xf32> to vector<8x1xf32>
    %103 = vector.broadcast %102 : vector<8x1xf32> to vector<8x256xf32>
    %104 = arith.mulf %103, %68 : vector<8x256xf32>
    %105 = arith.addf %101, %104 : vector<8x256xf32>
    %106 = vector.extract_strided_slice %69 {offsets = [0, 8], sizes = [8, 1], strides = [1, 1]} : vector<8x9xf32> to vector<8x1xf32>
    %107 = vector.broadcast %106 : vector<8x1xf32> to vector<8x256xf32>
    %108 = arith.mulf %107, %76 : vector<8x256xf32>
    %109 = arith.addf %105, %108 : vector<8x256xf32>
    %c16_i32_20 = arith.constant 16 : i32
    %110 = tpu.dynamic_rotate %87 by %c16_i32_20 dim 1 : vector<8x256xf32>, i32 -> vector<8x256xf32>
    %111 = arith.addf %110, %98 : vector<8x256xf32>
    %c240_i32_21 = arith.constant 240 : i32
    %112 = tpu.dynamic_rotate %109 by %c240_i32_21 dim 1 : vector<8x256xf32>, i32 -> vector<8x256xf32>
    %113 = arith.addf %111, %112 : vector<8x256xf32>
    %114 = vector.broadcast %70 : vector<8x1xf32> to vector<8x256xf32>
    %115 = arith.addf %113, %114 : vector<8x256xf32>
    %c0_22 = arith.constant 0 : index
    %c0_23 = arith.constant 0 : index
    %116 = vector.load %arg6[%c0_22, %c0_23] : memref<8x256xf32, #tpu.memory_space<vmem>>, vector<8x256xf32>
    tpu.vector_store %arg6[%c0_22, %c0_23], %115 {strides = array<i32>} : memref<8x256xf32, #tpu.memory_space<vmem>>, vector<8x256xf32>,
    return
  }
  func.func @transform_0(%arg0: i32) -> (i32, i32) {
    %c0_i32 = arith.constant 0 : i32
    %c0_i32_0 = arith.constant 0 : i32
    return %arg0, %c0_i32 : i32, i32
  }
  func.func @transform_1(%arg0: i32) -> (i32, i32) {
    %c0_i32 = arith.constant 0 : i32
    %c0_i32_0 = arith.constant 0 : i32
    return %arg0, %c0_i32 : i32, i32
  }
  func.func @transform_2(%arg0: i32) -> (i32, i32) {
    %c0_i32 = arith.constant 0 : i32
    %c0_i32_0 = arith.constant 0 : i32
    return %arg0, %c0_i32 : i32, i32
  }
  func.func @transform_3(%arg0: i32) -> (i32, i32) {
    %c0_i32 = arith.constant 0 : i32
    %c0_i32_0 = arith.constant 0 : i32
    return %arg0, %c0_i32 : i32, i32
  }
  func.func @transform_4(%arg0: i32) -> (i32, i32) {
    %c0_i32 = arith.constant 0 : i32
    %c0_i32_0 = arith.constant 0 : i32
    return %arg0, %c0_i32 : i32, i32
  }
  func.func @transform_5(%arg0: i32) -> (i32, i32) {
    %c0_i32 = arith.constant 0 : i32
    %c0_i32_0 = arith.constant 0 : i32
    return %arg0, %c0_i32 : i32, i32
  }
}

</mosaic_0001>

<llo_original>
// kernel: tpu_custom_call.1
$region0: #{tpu_custom_call.1}
  #allocation0 [shape = 'u32[]', space=smem, size = 0x4, offset = 0x4, fixed_abs, tag = 'smem constant byte address 0x4 - core index']
  #allocation1 [shape = 'u32[72,128]{1,0:T(1,128)}', space=vmem, size = 0x9000, scoped, tag = 'internal scratch']
  %s0 = inlined_call_operand.vmem [shape: f32[8,256], index: 0, kind: input, shape index: {}]
  %s1 = inlined_call_operand.hbm [shape: f32[8,9], index: 1, kind: input, shape index: {}]
  %s2 = inlined_call_operand.vmem [shape: f32[8,1], index: 2, kind: input, shape index: {}]
  %s3 = inlined_call_operand.hbm [shape: f32[8,9], index: 3, kind: input, shape index: {}]
  %s4 = inlined_call_operand.vmem [shape: f32[8,1], index: 4, kind: input, shape index: {}]
  %s5 = inlined_call_operand.hbm [shape: f32[8,256], index: 5, kind: output, shape index: {}]
  %s6 = sld [smem:[#allocation0]]
  $region38: #{tpu_custom_call.1} parent=0
    _
  %s8 = ssub.s32 1, %s6
  %s9 = scalar_select 0, %s8, %s6
  $region1: #{tpu_custom_call.1} parent=0
    #allocation2 [shape = 'u8[4096]{0}', space=vmem, size = 0x1000, scoped, tag = 'input window, operand 1, single buffered']
    #allocation3 [shape = 's32[1]{0}', space=sflag, size = 0x4, scoped, tag = 'scoped memory for tpu_custom_call.1']
    #allocation4 [shape = 's32[1]{0}', space=sflag, size = 0x4, scoped, tag = 'scoped memory for tpu_custom_call.1']
    #allocation5 [shape = 'u8[4096]{0}', space=vmem, size = 0x1000, scoped, tag = 'input window, operand 3, single buffered']
    #allocation6 [shape = 's32[1]{0}', space=sflag, size = 0x4, scoped, tag = 'scoped memory for tpu_custom_call.1']
    #allocation7 [shape = 'u8[8192]{0}', space=vmem, size = 0x2000, scoped, tag = 'output window, operand 0, single buffered']
    %10 = vsyncpa [#allocation3], 0
    %11 = vsyncpa [#allocation6], 0
    %12 = vsyncpa [#allocation4], 0
    // Predicated region
    $region2: #{tpu_custom_call.1} parent=1 // pred_check
      _
    $region3: #{tpu_custom_call.1} parent=1 // pred_check_branch
      %14 = sbr.rel (0) target = $region5
    $region4: #{tpu_custom_call.1} parent=1 // pred_region
      _
    $region5: #{tpu_custom_call.1} parent=1 // pred_fallthru
      _
    // Predicated region
    $region6: #{tpu_custom_call.1} parent=1 // pred_check
      _
    $region7: #{tpu_custom_call.1} parent=1 // pred_check_branch
      %16 = sbr.rel (0) target = $region9
    $region8: #{tpu_custom_call.1} parent=1 // pred_region
      %18 = vsyncadd [#allocation3], 0
      %s20 = sshll.u32 %s1, 4
      %s21 = int_to_ptr.hbm [resolvable:$true] %s20
      %s22 = sshll.u32 [#allocation2], 4
      %s23 = int_to_ptr.vmem [resolvable:$true] %s22
      %25 = dma.hbm_to_vmem [thread:$0]  %s21, 128, %s23, [#allocation3]
    $region9: #{tpu_custom_call.1} parent=1 // pred_fallthru
      _
    // Predicated region
    $region10: #{tpu_custom_call.1} parent=1 // pred_check
      _
    $region11: #{tpu_custom_call.1} parent=1 // pred_check_branch
      %27 = sbr.rel (0) target = $region13
    $region12: #{tpu_custom_call.1} parent=1 // pred_region
      _
    $region13: #{tpu_custom_call.1} parent=1 // pred_fallthru
      _
    // Predicated region
    $region14: #{tpu_custom_call.1} parent=1 // pred_check
      _
    $region15: #{tpu_custom_call.1} parent=1 // pred_check_branch
      %29 = sbr.rel (0) target = $region17
    $region16: #{tpu_custom_call.1} parent=1 // pred_region
      %31 = vsyncadd [#allocation6], 0
      %s33 = sshll.u32 %s3, 4
      %s34 = int_to_ptr.hbm [resolvable:$true] %s33
      %s35 = sshll.u32 [#allocation5], 4
      %s36 = int_to_ptr.vmem [resolvable:$true] %s35
      %38 = dma.hbm_to_vmem [thread:$0]  %s34, 128, %s36, [#allocation6]
    $region17: #{tpu_custom_call.1} parent=1 // pred_fallthru
      _
    // Predicated region
    $region18: #{tpu_custom_call.1} parent=1 // pred_check
      _
    $region19: #{tpu_custom_call.1} parent=1 // pred_check_branch
      %40 = sbr.rel (0) target = $region21
    $region20: #{tpu_custom_call.1} parent=1 // pred_region
      _
    $region21: #{tpu_custom_call.1} parent=1 // pred_fallthru
      _
    // Predicated region
    $region22: #{tpu_custom_call.1} parent=1 // pred_check
      _
    $region23: #{tpu_custom_call.1} parent=1 // pred_check_branch
      %42 = sbr.rel (0) target = $region25
    $region24: #{tpu_custom_call.1} parent=1 // pred_region
      %44 = dma.done [#allocation3], 128
    $region25: #{tpu_custom_call.1} parent=1 // pred_fallthru
      _
    // Predicated region
    $region26: #{tpu_custom_call.1} parent=1 // pred_check
      _
    $region27: #{tpu_custom_call.1} parent=1 // pred_check_branch
      %46 = sbr.rel (0) target = $region29
    $region28: #{tpu_custom_call.1} parent=1 // pred_region
      %48 = dma.done [#allocation6], 128
    $region29: #{tpu_custom_call.1} parent=1 // pred_fallthru
      _
    %v49 = vld [vmem:[%s0] sm:$0xff]
    %v50 = vld [vmem:[%s0 + $0x8] sm:$0xff]
    %v51 = vlaneseq
    %v52 = vand.u32 %v51, 127
    %v53 = vadd.s32 %v52, 128
    %vm54 = vcmp.lt.s32.totalorder %v52, 0
    %v55 = vsub.s32 0, %v52
    %v56 = vsel %vm54, %v55, %v52
    %v57 = vshrl.u32 %v56, 4
    %v58 = vand.u32 %v56, 15
    %v59 = vsub.s32 0, %v58
    %v60 = vsel %vm54, %v59, %v58
    %vm61 = vcmp.lt.s32.totalorder %v53, 0
    %v62 = vsub.s32 0, %v53
    %v63 = vsel %vm61, %v62, %v53
    %v64 = vshrl.u32 %v63, 4
    %v65 = vand.u32 %v63, 15
    %v66 = vsub.s32 0, %v65
    %v67 = vsel %vm61, %v66, %v65
    %vm68 = vcmp.ne.s32.totalorder %v60, 0
    %vm69 = vcmp.ne.s32.totalorder %v67, 0
    %vm70 = vcmp.lt.s32.totalorder %v60, 0
    %vm71 = vcmp.lt.s32.totalorder %v67, 0
    %vm72 = vmand %vm70, %vm68
    %vm73 = vmand %vm71, %vm69
    %v74 = vadd.s32 %v60, 16
    %v75 = vadd.s32 %v67, 16
    %v76 = vsel %vm72, %v74, %v60
    %v77 = vsel %vm73, %v75, %v67
    %vm78 = vcmp.eq.s32.totalorder %v76, 0
    %vm79 = vcmp.eq.s32.totalorder %v77, 0
    %vm80 = vcmp.eq.s32.totalorder %v76, 15
    %vm81 = vcmp.eq.s32.totalorder %v77, 15
    %v82 = vld [vmem:[#allocation2] sm:$0xff]
    %v83 = vld [vmem:[%s2] sm:$0xff]
    %84 = vrot.lane.b32.xlu0 %v49, 113
    %v85 = vpop.permute.xlu0 %84
    %86 = vrot.lane.b32.xlu0 %v50, 113
    %v87 = vpop.permute.xlu0 %86
    %vm88 = vcmp.lt.s32.totalorder %v52, 113
    %v89 = vsel %vm88, %v85, %v87
    %v90 = vsel %vm88, %v87, %v85
    %91 = vrot.lane.b32.xlu0 %v49, 1
    %v92 = vpop.permute.xlu0 %91
    %93 = vrot.lane.b32.xlu0 %v50, 1
    %v94 = vpop.permute.xlu0 %93
    %vm95 = vcmp.lt.s32.totalorder %v52, 1
    %v96 = vsel %vm95, %v92, %v94
    %v97 = vsel %vm95, %v94, %v92
    %v98 = vsel %vm78, %v89, %v97
    %v99 = vsel %vm79, %v90, %v96
    %100 = vrot.lane.b32.xlu0 %v49, 15
    %v101 = vpop.permute.xlu0 %100
    %102 = vrot.lane.b32.xlu0 %v50, 15
    %v103 = vpop.permute.xlu0 %102
    %vm104 = vcmp.lt.s32.totalorder %v52, 15
    %v105 = vsel %vm104, %v101, %v103
    %v106 = vsel %vm104, %v103, %v101
    %107 = vrot.lane.b32.xlu0 %v49, 127
    %v108 = vpop.permute.xlu0 %107
    %109 = vrot.lane.b32.xlu0 %v50, 127
    %v110 = vpop.permute.xlu0 %109
    %vm111 = vcmp.lt.s32.totalorder %v52, 127
    %v112 = vsel %vm111, %v108, %v110
    %v113 = vsel %vm111, %v110, %v108
    %v114 = vsel %vm80, %v106, %v112
    %v115 = vsel %vm81, %v105, %v113
    %117 = vset.pattern.permute.xlu0 0
    %118 = vperm.xlu0 %117, %v82
    %v119 = vpop.permute.xlu0 %118
    %v121 = vmul.f32 %v119, %v98
    %v122 = vmul.f32 %v119, %v99
    %123 = vset.pattern.permute.xlu0 1
    %124 = vperm.xlu0 %123, %v82
    %v125 = vpop.permute.xlu0 %124
    %v127 = vmul.f32 %v125, %v49
    %v128 = vmul.f32 %v125, %v50
    %v129 = vadd.f32 %v121, %v127
    %v130 = vadd.f32 %v122, %v128
    %131 = vset.pattern.permute.xlu0 2
    %132 = vperm.xlu0 %131, %v82
    %v133 = vpop.permute.xlu0 %132
    %v135 = vmul.f32 %v133, %v114
    %v136 = vmul.f32 %v133, %v115
    %v137 = vadd.f32 %v129, %v135
    %v138 = vadd.f32 %v130, %v136
    %139 = vset.pattern.permute.xlu0 3
    %140 = vperm.xlu0 %139, %v82
    %v141 = vpop.permute.xlu0 %140
    %v143 = vmul.f32 %v141, %v98
    %v144 = vmul.f32 %v141, %v99
    %145 = vset.pattern.permute.xlu0 4
    %146 = vperm.xlu0 %145, %v82
    %v147 = vpop.permute.xlu0 %146
    %v149 = vmul.f32 %v147, %v49
    %v150 = vmul.f32 %v147, %v50
    %v151 = vadd.f32 %v143, %v149
    %v152 = vadd.f32 %v144, %v150
    %153 = vset.pattern.permute.xlu0 5
    %154 = vperm.xlu0 %153, %v82
    %v155 = vpop.permute.xlu0 %154
    %v157 = vmul.f32 %v155, %v114
    %v158 = vmul.f32 %v155, %v115
    %v159 = vadd.f32 %v151, %v157
    %v160 = vadd.f32 %v152, %v158
    %161 = vset.pattern.permute.xlu0 6
    %162 = vperm.xlu0 %161, %v82
    %v163 = vpop.permute.xlu0 %162
    %v165 = vmul.f32 %v163, %v98
    %v166 = vmul.f32 %v163, %v99
    %167 = vset.pattern.permute.xlu0 7
    %168 = vperm.xlu0 %167, %v82
    %v169 = vpop.permute.xlu0 %168
    %v171 = vmul.f32 %v169, %v49
    %v172 = vmul.f32 %v169, %v50
    %v173 = vadd.f32 %v165, %v171
    %v174 = vadd.f32 %v166, %v172
    %175 = vset.pattern.permute.xlu0 8
    %176 = vperm.xlu0 %175, %v82
    %v177 = vpop.permute.xlu0 %176
    %v179 = vmul.f32 %v177, %v114
    %v180 = vmul.f32 %v177, %v115
    %v181 = vadd.f32 %v173, %v179
    %v182 = vadd.f32 %v174, %v180
    %183 = vrot.lane.b32.xlu0 %v137, 16
    %v184 = vpop.permute.xlu0 %183
    %185 = vrot.lane.b32.xlu0 %v138, 16
    %v186 = vpop.permute.xlu0 %185
    %vm187 = vcmp.lt.s32.totalorder %v52, 16
    %v188 = vsel %vm187, %v184, %v186
    %v189 = vsel %vm187, %v186, %v184
    %v190 = vadd.f32 %v189, %v159
    %v191 = vadd.f32 %v188, %v160
    %192 = vrot.lane.b32.xlu0 %v181, 112
    %v193 = vpop.permute.xlu0 %192
    %194 = vrot.lane.b32.xlu0 %v182, 112
    %v195 = vpop.permute.xlu0 %194
    %vm196 = vcmp.lt.s32.totalorder %v52, 112
    %v197 = vsel %vm196, %v193, %v195
    %v198 = vsel %vm196, %v195, %v193
    %v199 = vadd.f32 %v190, %v197
    %v200 = vadd.f32 %v191, %v198
    %202 = vset.pattern.permute.xlu0 0
    %203 = vperm.xlu0 %202, %v83
    %v204 = vpop.permute.xlu0 %203
    %v206 = vadd.f32 %v199, %v204
    %v207 = vadd.f32 %v200, %v204
    %v208 = vld [vmem:[#allocation5] sm:$0xff]
    %v209 = vld [vmem:[%s4] sm:$0xff]
    %210 = vrot.lane.b32.xlu0 %v206, 113
    %v211 = vpop.permute.xlu0 %210
    %212 = vrot.lane.b32.xlu0 %v207, 113
    %v213 = vpop.permute.xlu0 %212
    %v214 = vsel %vm88, %v211, %v213
    %v215 = vsel %vm88, %v213, %v211
    %216 = vrot.lane.b32.xlu0 %v206, 1
    %v217 = vpop.permute.xlu0 %216
    %218 = vrot.lane.b32.xlu0 %v207, 1
    %v219 = vpop.permute.xlu0 %218
    %v220 = vsel %vm95, %v217, %v219
    %v221 = vsel %vm95, %v219, %v217
    %v222 = vsel %vm78, %v214, %v221
    %v223 = vsel %vm79, %v215, %v220
    %224 = vrot.lane.b32.xlu0 %v206, 15
    %v225 = vpop.permute.xlu0 %224
    %226 = vrot.lane.b32.xlu0 %v207, 15
    %v227 = vpop.permute.xlu0 %226
    %v228 = vsel %vm104, %v225, %v227
    %v229 = vsel %vm104, %v227, %v225
    %230 = vrot.lane.b32.xlu0 %v206, 127
    %v231 = vpop.permute.xlu0 %230
    %232 = vrot.lane.b32.xlu0 %v207, 127
    %v233 = vpop.permute.xlu0 %232
    %v234 = vsel %vm111, %v231, %v233
    %v235 = vsel %vm111, %v233, %v231
    %v236 = vsel %vm80, %v229, %v234
    %v237 = vsel %vm81, %v228, %v235
    %239 = vset.pattern.permute.xlu0 0
    %240 = vperm.xlu0 %239, %v208
    %v241 = vpop.permute.xlu0 %240
    %v243 = vmul.f32 %v241, %v222
    %v244 = vmul.f32 %v241, %v223
    %245 = vset.pattern.permute.xlu0 1
    %246 = vperm.xlu0 %245, %v208
    %v247 = vpop.permute.xlu0 %246
    %v249 = vmul.f32 %v247, %v206
    %v250 = vmul.f32 %v247, %v207
    %v251 = vadd.f32 %v243, %v249
    %v252 = vadd.f32 %v244, %v250
    %253 = vset.pattern.permute.xlu0 2
    %254 = vperm.xlu0 %253, %v208
    %v255 = vpop.permute.xlu0 %254
    %v257 = vmul.f32 %v255, %v236
    %v258 = vmul.f32 %v255, %v237
    %v259 = vadd.f32 %v251, %v257
    %v260 = vadd.f32 %v252, %v258
    %261 = vset.pattern.permute.xlu0 3
    %262 = vperm.xlu0 %261, %v208
    %v263 = vpop.permute.xlu0 %262
    %v265 = vmul.f32 %v263, %v222
    %v266 = vmul.f32 %v263, %v223
    %267 = vset.pattern.permute.xlu0 4
    %268 = vperm.xlu0 %267, %v208
    %v269 = vpop.permute.xlu0 %268
    %v271 = vmul.f32 %v269, %v206
    %v272 = vmul.f32 %v269, %v207
    %v273 = vadd.f32 %v265, %v271
    %v274 = vadd.f32 %v266, %v272
    %275 = vset.pattern.permute.xlu0 5
    %276 = vperm.xlu0 %275, %v208
    %v277 = vpop.permute.xlu0 %276
    %v279 = vmul.f32 %v277, %v236
    %v280 = vmul.f32 %v277, %v237
    %v281 = vadd.f32 %v273, %v279
    %v282 = vadd.f32 %v274, %v280
    %283 = vset.pattern.permute.xlu0 6
    %284 = vperm.xlu0 %283, %v208
    %v285 = vpop.permute.xlu0 %284
    %v287 = vmul.f32 %v285, %v222
    %v288 = vmul.f32 %v285, %v223
    %289 = vset.pattern.permute.xlu0 7
    %290 = vperm.xlu0 %289, %v208
    %v291 = vpop.permute.xlu0 %290
    %v293 = vmul.f32 %v291, %v206
    %v294 = vmul.f32 %v291, %v207
    %v295 = vadd.f32 %v287, %v293
    %v296 = vadd.f32 %v288, %v294
    %297 = vset.pattern.permute.xlu0 8
    %298 = vperm.xlu0 %297, %v208
    %v299 = vpop.permute.xlu0 %298
    %v301 = vmul.f32 %v299, %v236
    %v302 = vmul.f32 %v299, %v237
    %v303 = vadd.f32 %v295, %v301
    %v304 = vadd.f32 %v296, %v302
    %305 = vrot.lane.b32.xlu0 %v259, 16
    %v306 = vpop.permute.xlu0 %305
    %307 = vrot.lane.b32.xlu0 %v260, 16
    %v308 = vpop.permute.xlu0 %307
    %v309 = vsel %vm187, %v306, %v308
    %v310 = vsel %vm187, %v308, %v306
    %v311 = vadd.f32 %v310, %v281
    %v312 = vadd.f32 %v309, %v282
    %313 = vrot.lane.b32.xlu0 %v303, 112
    %v314 = vpop.permute.xlu0 %313
    %315 = vrot.lane.b32.xlu0 %v304, 112
    %v316 = vpop.permute.xlu0 %315
    %v317 = vsel %vm196, %v314, %v316
    %v318 = vsel %vm196, %v316, %v314
    %v319 = vadd.f32 %v311, %v317
    %v320 = vadd.f32 %v312, %v318
    %322 = vset.pattern.permute.xlu0 0
    %323 = vperm.xlu0 %322, %v209
    %v324 = vpop.permute.xlu0 %323
    %v326 = vadd.f32 %v319, %v324
    %v327 = vadd.f32 %v320, %v324
    %328 = vst [vmem:[#allocation7] sm:$0xff] %v326
    %329 = vst [vmem:[#allocation7 + $0x8] sm:$0xff] %v327
    // Predicated region
    $region30: #{tpu_custom_call.1} parent=1 // pred_check
      _
    $region31: #{tpu_custom_call.1} parent=1 // pred_check_branch
      %331 = sbr.rel (0) target = $region33
    $region32: #{tpu_custom_call.1} parent=1 // pred_region
      %333 = vsyncadd [#allocation4], 0
      %s335 = sshll.u32 [#allocation7], 4
      %s336 = int_to_ptr.vmem [resolvable:$true] %s335
      %s337 = sshll.u32 %s5, 4
      %s338 = int_to_ptr.hbm [resolvable:$true] %s337
      %340 = dma.vmem_to_hbm [thread:$0]  %s336, 256, %s338, [#allocation4]
    $region33: #{tpu_custom_call.1} parent=1 // pred_fallthru
      _
    // Predicated region
    $region34: #{tpu_custom_call.1} parent=1 // pred_check
      _
    $region35: #{tpu_custom_call.1} parent=1 // pred_check_branch
      %342 = sbr.rel (0) target = $region37
    $region36: #{tpu_custom_call.1} parent=1 // pred_region
      %344 = dma.done [#allocation4], 256
    $region37: #{tpu_custom_call.1} parent=1 // pred_fallthru
      _
    %345 = vsyncpa [#allocation3], 1
    %346 = vsyncpa [#allocation6], 1
    %347 = vsyncpa [#allocation4], 1

</llo_original>
